<compile_context>
chip_gen: v6e
topology: v6e:2x2x1
jax: 0.10.0
libtpu: 0.0.40
codegen_flags: <defaults>
</compile_context>

<pallas_src>
import functools

import jax
import jax.numpy as jnp
import numpy as np
from jax.experimental import pallas as pl
from jax.experimental.pallas import tpu as pltpu

IN_EPS = 1e-5  # nn.InstanceNorm2d default eps


# ------------------------------------------------------------------- kernel --

def _gated_conv_in_kernel(p_ref, w_ref, aff_ref, o_ref):
    """One batch block. Per sample:  W(2C,K) @ patches(K,P)  ->  InstanceNorm
    (per sample, per channel over P, biased var, eps, affine)  ->  conv * sigmoid(gate).

    Spatial axis P stays on the lane (minor) dim throughout, so the matmul result,
    the VPU/EUP elementwise work, the XLU reductions and the final store are all
    lane-dense."""
    bblk = p_ref.shape[0]
    c2 = w_ref.shape[0]
    c = c2 // 2

    w = w_ref[...]                       # (2C, K) bf16, resident across the block
    gamma = aff_ref[:, 0:1]              # (2C, 1) f32
    beta = aff_ref[:, 1:2]               # (2C, 1) f32

    # Static unroll over samples in the block (block_batch is kept small, <=16).
    for b in range(bblk):
        # (2C, K) @ (K, P) -> (2C, P); f32 accumulation on the MXU.
        y = jax.lax.dot_general(
            w, p_ref[b], (((1,), (0,)), ((), ())),
            preferred_element_type=jnp.float32)

        # InstanceNorm2d. The conv bias is a per-channel constant, so it cancels
        # exactly under the centering below and never enters the kernel.
        mean = jnp.mean(y, axis=1, keepdims=True)                    # (2C, 1)
        centered = y - mean
        var = jnp.mean(centered * centered, axis=1, keepdims=True)   # biased var
        scale = gamma * jax.lax.rsqrt(var + IN_EPS)                  # fold affine in
        yn = centered * scale + beta                                 # (2C, P)

        conv = yn[:c]
        gate = yn[c:]
        o_ref[b] = (conv * jax.nn.sigmoid(gate)).astype(o_ref.dtype)  # lane-dense store


# ------------------------------------------------------------------ wrapper --

def _im2col_kp(x, kh, kw, sh, sw, ph, pw):
    """(B, Cin, H, W) -> (B, Cin*KH*KW, OH*OW).  K is ordered (cin, kh, kw) to match
    PyTorch's conv weight flattening; the spatial positions P sit on the minor axis
    so the downstream kernel is lane-dense."""
    B, C, H, W = x.shape
    oh = (H + 2 * ph - kh) // sh + 1
    ow = (W + 2 * pw - kw) // sw + 1
    xp = jnp.pad(x, ((0, 0), (0, 0), (ph, ph), (pw, pw)))
    cols = []
    for i in range(kh):
        for j in range(kw):
            cols.append(xp[:, :, i:i + (oh - 1) * sh + 1:sh, j:j + (ow - 1) * sw + 1:sw])
    patches = jnp.stack(cols, axis=2)                    # (B, C, KH*KW, OH, OW)
    patches = patches.reshape(B, C * kh * kw, oh * ow)   # (B, K, P)
    return patches, oh, ow


@functools.partial(jax.jit, static_argnames=("stride", "padding", "block_batch"))
def downsample_generator_forward(x, params, *, stride, padding, block_batch=None):
    conv_w, gate_w = params["conv_w"], params["gate_w"]
    c_out, c_in, kh, kw = conv_w.shape
    sh, sw = (stride, stride) if isinstance(stride, int) else tuple(stride)
    ph, pw = (padding, padding) if isinstance(padding, int) else tuple(padding)
    B = x.shape[0]

    patches, oh, ow = _im2col_kp(x.astype(jnp.float32), kh, kw, sh, sw, ph, pw)
    P = oh * ow
    K = c_in * kh * kw
    # bf16 matmul inputs halve HBM traffic of the dominant operand; accumulation and
    # all post-matmul math remain f32 inside the kernel.
    patches = patches.astype(jnp.bfloat16)

    # Concatenate both branches along output channels -> one matmul per sample.
    w_cat = jnp.concatenate(
        [conv_w.reshape(c_out, K), gate_w.reshape(c_out, K)], axis=0
    ).astype(jnp.bfloat16)                                            # (2C, K)
    # Pack InstanceNorm affine params into a single tiny input: columns [gamma, beta].
    affine = jnp.stack(
        [jnp.concatenate([params["conv_gamma"], params["gate_gamma"]]),
         jnp.concatenate([params["conv_beta"], params["gate_beta"]])],
        axis=1).astype(jnp.float32)                                   # (2C, 2)

    if block_batch is None:
        # (a) stay well inside scoped VMEM (double-buffered bf16 patches + f32 out),
        #     sized for v7x's smaller 64 MiB physical / 32 MiB scoped VMEM;
        # (b) keep >=2 grid steps when B >= 2 so "parallel" can shard the batch axis
        #     across v7x's two TensorCores;
        # (c) amortize the ~0.35us per-grid-step overhead at tiny spatial sizes;
        # (d) bound the static unroll inside the kernel.
        bytes_per_sample = P * (2 * K + 4 * c_out)
        bb_vmem = max(1, (6 * 1024 * 1024) // max(1, bytes_per_sample))
        bb_amort = max(1, 512 // max(1, P))
        bb_mega = max(1, pl.cdiv(B, 2))
        block_batch = max(1, min(bb_vmem, bb_amort, bb_mega, 16))

    b_pad = pl.cdiv(B, block_batch) * block_batch
    if b_pad != B:
        patches = jnp.pad(patches, ((0, b_pad - B), (0, 0), (0, 0)))

    out = pl.pallas_call(
        _gated_conv_in_kernel,
        out_shape=jax.ShapeDtypeStruct((b_pad, c_out, P), jnp.float32),
        grid=(b_pad // block_batch,),
        in_specs=[
            pl.BlockSpec((block_batch, K, P), lambda b: (b, 0, 0)),   # patches (bf16)
            pl.BlockSpec((2 * c_out, K), lambda b: (0, 0)),           # [Wc; Wg] (bf16)
            pl.BlockSpec((2 * c_out, 2), lambda b: (0, 0)),           # [gamma | beta]
        ],
        out_specs=pl.BlockSpec((block_batch, c_out, P), lambda b: (b, 0, 0)),
        compiler_params=pltpu.CompilerParams(
            dimension_semantics=("parallel",),
            vmem_limit_bytes=32 * 1024 * 1024),
    )(patches, w_cat, affine)

    # (B, C, P) is already NCHW-ordered: just reshape P -> (OH, OW).
    return out[:B].reshape(B, c_out, oh, ow)


# ---------------------------------------------------------- pure-JAX reference --

def _reference_forward(x, params, *, stride, padding):
    dn = jax.lax.conv_dimension_numbers(x.shape, params["conv_w"].shape,
                                        ("NCHW", "OIHW", "NCHW"))

    def branch(w, b, gamma, beta):
        y = jax.lax.conv_general_dilated(
            x, w, (stride, stride), [(padding, padding), (padding, padding)],
            dimension_numbers=dn)
        y = y + b[None, :, None, None]
        mean = y.mean(axis=(2, 3), keepdims=True)
        var = y.var(axis=(2, 3), keepdims=True)
        y = (y - mean) / jnp.sqrt(var + IN_EPS)
        return y * gamma[None, :, None, None] + beta[None, :, None, None]

    a = branch(params["conv_w"], params["conv_b"],
               params["conv_gamma"], params["conv_beta"])
    g = branch(params["gate_w"], params["gate_b"],
               params["gate_gamma"], params["gate_beta"])
    return a * jax.nn.sigmoid(g)


# --------------------------------------------------------------------- main --

if __name__ == "__main__":
    key = jax.random.PRNGKey(0)
    B, in_ch, H, W = 2, 4, 16, 16
    out_ch, ksz, stride, padding = 8, 3, 2, 1

    kx, kw1, kb1, kw2, kb2, kg1, kg2, kb3, kb4 = jax.random.split(key, 9)
    x = jax.random.normal(kx, (B, in_ch, H, W), jnp.float32)

    fan_in = in_ch * ksz * ksz
    bound = 1.0 / np.sqrt(fan_in)
    params = {
        "conv_w": jax.random.uniform(kw1, (out_ch, in_ch, ksz, ksz), jnp.float32, -bound, bound),
        "conv_b": jax.random.uniform(kb1, (out_ch,), jnp.float32, -bound, bound),
        "gate_w": jax.random.uniform(kw2, (out_ch, in_ch, ksz, ksz), jnp.float32, -bound, bound),
        "gate_b": jax.random.uniform(kb2, (out_ch,), jnp.float32, -bound, bound),
        # InstanceNorm2d(affine=True) params (perturbed from 1/0 init to exercise the affine path)
        "conv_gamma": 1.0 + 0.1 * jax.random.normal(kg1, (out_ch,), jnp.float32),
        "conv_beta": 0.1 * jax.random.normal(kb3, (out_ch,), jnp.float32),
        "gate_gamma": 1.0 + 0.1 * jax.random.normal(kg2, (out_ch,), jnp.float32),
        "gate_beta": 0.1 * jax.random.normal(kb4, (out_ch,), jnp.float32),
    }

    out = downsample_generator_forward(x, params, stride=stride, padding=padding)
    out = jax.block_until_ready(out)

    assert out.shape == (B, out_ch, H // stride, W // stride)
    assert bool(jnp.all(jnp.isfinite(out)))

    ref = _reference_forward(x, params, stride=stride, padding=padding)
    err = float(jnp.max(jnp.abs(out - ref)))
    # Tolerance deliberately sized for bf16 matmul inputs (f32 reference); an
    # all-f32 path would sit near 1e-5.
    assert err < 3e-2, f"max abs err vs reference: {err}"

    print("KERNEL_OK")
</pallas_src>

<mosaic_0001>
module attributes {stable_mosaic.version = 11 : i64} {
  func.func @_gated_conv_in_kernel(%arg0: i32, %arg1: memref<1x36x64xbf16, #tpu.memory_space<vmem>>, %arg2: memref<16x36xbf16, #tpu.memory_space<vmem>>, %arg3: memref<16x2xf32, #tpu.memory_space<vmem>>, %arg4: memref<1x8x64xf32, #tpu.memory_space<vmem>>) attributes {dimension_semantics = [#tpu.dimension_semantics<parallel>], iteration_bounds = array<i64: 2>, scalar_prefetch = 0 : i64, scratch_operands = 0 : i64, tpu.core_type = #tpu.core_type<tc>, window_params = [{transform_indices = @transform_0, window_bounds = array<i64: 1, 36, 64>}, {pipeline_mode = #tpu.pipeline_mode<synchronous>, transform_indices = @transform_1, window_bounds = array<i64: 16, 36>}, {pipeline_mode = #tpu.pipeline_mode<synchronous>, transform_indices = @transform_2, window_bounds = array<i64: 16, 2>}, {transform_indices = @transform_3, window_bounds = array<i64: 1, 8, 64>}]} {
    %c0 = arith.constant 0 : index
    %c0_0 = arith.constant 0 : index
    %0 = vector.load %arg2[%c0, %c0_0] : memref<16x36xbf16, #tpu.memory_space<vmem>>, vector<16x36xbf16>
    %c0_1 = arith.constant 0 : index
    %c0_2 = arith.constant 0 : index
    %1 = vector.load %arg3[%c0_1, %c0_2] : memref<16x2xf32, #tpu.memory_space<vmem>>, vector<16x1xf32>
    %c0_3 = arith.constant 0 : index
    %c1 = arith.constant 1 : index
    %2 = vector.load %arg3[%c0_3, %c1] : memref<16x2xf32, #tpu.memory_space<vmem>>, vector<16x1xf32>
    %c0_4 = arith.constant 0 : index
    %c0_5 = arith.constant 0 : index
    %c0_6 = arith.constant 0 : index
    %3 = vector.load %arg1[%c0_4, %c0_5, %c0_6] : memref<1x36x64xbf16, #tpu.memory_space<vmem>>, vector<1x36x64xbf16>
    %4 = vector.shape_cast %3 : vector<1x36x64xbf16> to vector<36x64xbf16>
    %cst = arith.constant dense<0.000000e+00> : vector<16x64xf32>
    %5 = tpu.matmul %0, %4, %cst {dimension_numbers = #tpu.dot_dimension_numbers<[1], [0], [0], [1], [0, 0, 1, 1], [], []>} : vector<16x36xbf16>, vector<36x64xbf16>, vector<16x64xf32> -> vector<16x64xf32>
    %cst_7 = arith.constant dense<0.000000e+00> : vector<16xf32>
    %6 = vector.multi_reduction <add>, %5, %cst_7 [1] : vector<16x64xf32> to vector<16xf32>
    %7 = vector.shape_cast %6 : vector<16xf32> to vector<16x1xf32>
    %cst_8 = arith.constant 6.400000e+01 : f32
    %8 = vector.broadcast %cst_8 : f32 to vector<16x1xf32>
    %9 = arith.divf %7, %8 : vector<16x1xf32>
    %10 = vector.broadcast %9 : vector<16x1xf32> to vector<16x64xf32>
    %11 = arith.subf %5, %10 : vector<16x64xf32>
    %12 = arith.mulf %11, %11 : vector<16x64xf32>
    %cst_9 = arith.constant dense<0.000000e+00> : vector<16xf32>
    %13 = vector.multi_reduction <add>, %12, %cst_9 [1] : vector<16x64xf32> to vector<16xf32>
    %14 = vector.shape_cast %13 : vector<16xf32> to vector<16x1xf32>
    %cst_10 = arith.constant 6.400000e+01 : f32
    %15 = vector.broadcast %cst_10 : f32 to vector<16x1xf32>
    %16 = arith.divf %14, %15 : vector<16x1xf32>
    %cst_11 = arith.constant 9.99999974E-6 : f32
    %17 = vector.broadcast %cst_11 : f32 to vector<16x1xf32>
    %18 = arith.addf %16, %17 : vector<16x1xf32>
    %19 = math.rsqrt %18 : vector<16x1xf32>
    %20 = arith.mulf %1, %19 : vector<16x1xf32>
    %21 = vector.broadcast %20 : vector<16x1xf32> to vector<16x64xf32>
    %22 = arith.mulf %11, %21 : vector<16x64xf32>
    %23 = vector.broadcast %2 : vector<16x1xf32> to vector<16x64xf32>
    %24 = arith.addf %22, %23 : vector<16x64xf32>
    %25 = vector.extract_strided_slice %24 {offsets = [0, 0], sizes = [8, 64], strides = [1, 1]} : vector<16x64xf32> to vector<8x64xf32>
    %26 = vector.extract_strided_slice %24 {offsets = [8, 0], sizes = [8, 64], strides = [1, 1]} : vector<16x64xf32> to vector<8x64xf32>
    %27 = arith.negf %26 : vector<8x64xf32>
    %28 = math.exp %27 : vector<8x64xf32>
    %cst_12 = arith.constant 1.000000e+00 : f32
    %29 = vector.broadcast %cst_12 : f32 to vector<8x64xf32>
    %30 = arith.addf %29, %28 : vector<8x64xf32>
    %31 = arith.divf %29, %30 : vector<8x64xf32>
    %32 = arith.mulf %25, %31 : vector<8x64xf32>
    %c0_13 = arith.constant 0 : index
    %c0_14 = arith.constant 0 : index
    %c0_15 = arith.constant 0 : index
    %33 = vector.load %arg4[%c0_13, %c0_14, %c0_15] : memref<1x8x64xf32, #tpu.memory_space<vmem>>, vector<1x8x64xf32>
    %34 = vector.shape_cast %33 : vector<1x8x64xf32> to vector<8x64xf32>
    %35 = vector.shape_cast %32 : vector<8x64xf32> to vector<1x8x64xf32>
    tpu.vector_store %arg4[%c0_13, %c0_14, %c0_15], %35 {strides = array<i32>} : memref<1x8x64xf32, #tpu.memory_space<vmem>>, vector<1x8x64xf32>,
    return
  }
  func.func @transform_0(%arg0: i32) -> (i32, i32, i32) {
    %c0_i32 = arith.constant 0 : i32
    %c0_i32_0 = arith.constant 0 : i32
    %c0_i32_1 = arith.constant 0 : i32
    return %arg0, %c0_i32, %c0_i32_0 : i32, i32, i32
  }
  func.func @transform_1(%arg0: i32) -> (i32, i32) {
    %c0_i32 = arith.constant 0 : i32
    %c0_i32_0 = arith.constant 0 : i32
    %c0_i32_1 = arith.constant 0 : i32
    return %c0_i32, %c0_i32_0 : i32, i32
  }
  func.func @transform_2(%arg0: i32) -> (i32, i32) {
    %c0_i32 = arith.constant 0 : i32
    %c0_i32_0 = arith.constant 0 : i32
    %c0_i32_1 = arith.constant 0 : i32
    return %c0_i32, %c0_i32_0 : i32, i32
  }
  func.func @transform_3(%arg0: i32) -> (i32, i32, i32) {
    %c0_i32 = arith.constant 0 : i32
    %c0_i32_0 = arith.constant 0 : i32
    %c0_i32_1 = arith.constant 0 : i32
    return %arg0, %c0_i32, %c0_i32_0 : i32, i32, i32
  }
}

</mosaic_0001>

<llo_original>
// kernel: downsample_generator_forward.1
$region0: #{downsample_generator_forward.1}
  #allocation0 [shape = 'u32[]', space=smem, size = 0x4, offset = 0x4, fixed_abs, tag = 'smem constant byte address 0x4 - core index']
  #allocation1 [shape = 'u32[144,128]{1,0:T(1,128)}', space=vmem, size = 0x12000, scoped, tag = 'internal scratch']
  %s0 = inlined_call_operand.vmem [shape: bf16[2,36,64], index: 0, kind: input, shape index: {}]
  %s1 = inlined_call_operand.vmem [shape: bf16[16,36], index: 1, kind: input, shape index: {}]
  %s2 = inlined_call_operand.vmem [shape: f32[16,2], index: 2, kind: input, shape index: {}]
  %s3 = inlined_call_operand.vmem [shape: f32[2,8,64], index: 3, kind: output, shape index: {}]
  %s4 = sld [smem:[#allocation0]]
  $region45: #{downsample_generator_forward.1} parent=0
    _
  %s6 = ssub.s32 1, %s4
  %s7 = scalar_select 0, %s6, %s4
  loop: start=0, step=1, limit=4
  $region2: #{downsample_generator_forward.1} parent=0 // loop_pre_header
    _
  $region3: #{downsample_generator_forward.1} parent=0 // loop_header
    %s9 = sphi 0, %s13
    %p10 = scmp.ge.s32.totalorder %s9, 4
    %s19 = sphi 0, %s21
    %s22 = sphi 0, %s19
    %s23 = sphi 0, %s22
    %s39 = sphi 0, %s23
    %s43 = sphi 0, %s43
    %s45 = sphi 0, %s43
    %s46 = sphi 0, %s45
    %s60 = sphi 0, %s46
    %s64 = sphi 0, %s64
    %s66 = sphi 0, %s64
    %s67 = sphi 0, %s66
    %s81 = sphi 0, %s67
    %s87 = sphi 0, %s89
    %s90 = sphi 0, %s87
    %s91 = sphi 0, %s90
    %s107 = sphi 0, %s91
  $region4: #{downsample_generator_forward.1} parent=0 // loop_header_branch
    %12 = sbr.rel (%p10) target = $region8
  $region5: #{downsample_generator_forward.1} parent=0 // loop_body
    %s14 = ssub.s32 %s9, 1
    %s15 = ssub.s32 %s9, 2
    %s16 = sadd.s32 %s9, 1
    %s17 = ssub.s32 %s9, %s16
    %p18 = scmp.eq.s32.totalorder %s17, 0
    %s20 = sadd.s32 %s19, 1
    %s21 = scalar_select %p18, %s19, %s20
    %p24 = pneg %p18
    %p25 = scmp.eq.s32.totalorder %s9, 1
    %p26 = por %p24, %p25
    %p27 = scmp.ne.s32.totalorder %s19, %s22
    %p28 = scmp.eq.s32.totalorder %s9, 0
    %p29 = por %p27, %p28
    %p30 = scmp.ne.s32.totalorder %s19, %s22
    %p31 = scmp.eq.s32.totalorder %s14, 1
    %p32 = por %p30, %p31
    %p33 = scmp.ne.s32.totalorder %s22, %s23
    %p34 = scmp.eq.s32.totalorder %s14, 0
    %p35 = por %p33, %p34
    %p36 = scmp.ne.s32.totalorder %s22, %s23
    %p37 = scmp.eq.s32.totalorder %s15, 1
    %p38 = por %p36, %p37
    %p40 = scmp.ne.s32.totalorder %s23, %s39
    %p41 = scmp.eq.s32.totalorder %s15, 0
    %p42 = por %p40, %p41
    %s44 = sadd.s32 %s43, 1
    %p47 = scmp.eq.s32.totalorder %s9, 1
    %p48 = scmp.ne.s32.totalorder %s43, %s45
    %p49 = scmp.eq.s32.totalorder %s9, 0
    %p50 = por %p48, %p49
    %p51 = scmp.ne.s32.totalorder %s43, %s45
    %p52 = scmp.eq.s32.totalorder %s14, 1
    %p53 = por %p51, %p52
    %p54 = scmp.ne.s32.totalorder %s45, %s46
    %p55 = scmp.eq.s32.totalorder %s14, 0
    %p56 = por %p54, %p55
    %p57 = scmp.ne.s32.totalorder %s45, %s46
    %p58 = scmp.eq.s32.totalorder %s15, 1
    %p59 = por %p57, %p58
    %p61 = scmp.ne.s32.totalorder %s46, %s60
    %p62 = scmp.eq.s32.totalorder %s15, 0
    %p63 = por %p61, %p62
    %s65 = sadd.s32 %s64, 1
    %p68 = scmp.eq.s32.totalorder %s9, 1
    %p69 = scmp.ne.s32.totalorder %s64, %s66
    %p70 = scmp.eq.s32.totalorder %s9, 0
    %p71 = por %p69, %p70
    %p72 = scmp.ne.s32.totalorder %s64, %s66
    %p73 = scmp.eq.s32.totalorder %s14, 1
    %p74 = por %p72, %p73
    %p75 = scmp.ne.s32.totalorder %s66, %s67
    %p76 = scmp.eq.s32.totalorder %s14, 0
    %p77 = por %p75, %p76
    %p78 = scmp.ne.s32.totalorder %s66, %s67
    %p79 = scmp.eq.s32.totalorder %s15, 1
    %p80 = por %p78, %p79
    %p82 = scmp.ne.s32.totalorder %s67, %s81
    %p83 = scmp.eq.s32.totalorder %s15, 0
    %p84 = por %p82, %p83
    %s85 = ssub.s32 %s9, %s16
    %p86 = scmp.eq.s32.totalorder %s85, 0
    %s88 = sadd.s32 %s87, 1
    %s89 = scalar_select %p86, %s87, %s88
    %p92 = pneg %p86
    %p93 = scmp.eq.s32.totalorder %s9, 1
    %p94 = por %p92, %p93
    %p95 = scmp.ne.s32.totalorder %s87, %s90
    %p96 = scmp.eq.s32.totalorder %s9, 0
    %p97 = por %p95, %p96
    %p98 = scmp.ne.s32.totalorder %s87, %s90
    %p99 = scmp.eq.s32.totalorder %s14, 1
    %p100 = por %p98, %p99
    %p101 = scmp.ne.s32.totalorder %s90, %s91
    %p102 = scmp.eq.s32.totalorder %s14, 0
    %p103 = por %p101, %p102
    %p104 = scmp.ne.s32.totalorder %s90, %s91
    %p105 = scmp.eq.s32.totalorder %s15, 1
    %p106 = por %p104, %p105
    %p108 = scmp.ne.s32.totalorder %s91, %s107
    %p109 = scmp.eq.s32.totalorder %s15, 0
    %p110 = por %p108, %p109
    %p111 = scmp.le.s32.totalorder 1, %s9
    %p112 = scmp.lt.s32.totalorder %s9, 3
    %p113 = pnand %p111, %p112
    %p114 = pneg %p113
    // Predicated region
    $region9: #{downsample_generator_forward.1} parent=5 // pred_check
      _
    $region10: #{downsample_generator_forward.1} parent=5 // pred_check_branch
      %116 = sbr.rel (%p113) target = $region12
    $region11: #{downsample_generator_forward.1} parent=5 // pred_region
      %s117 = ssub.s32 %s9, 1
      // Predicated region
      $region13: #{downsample_generator_forward.1} parent=11 // pred_check
        %p118 = pneg %p56
      $region14: #{downsample_generator_forward.1} parent=11 // pred_check_branch
        %120 = sbr.rel (%p118) target = $region16
      $region15: #{downsample_generator_forward.1} parent=11 // pred_region
        _
      $region16: #{downsample_generator_forward.1} parent=11 // pred_fallthru
        _
      // Predicated region
      $region17: #{downsample_generator_forward.1} parent=11 // pred_check
        %p121 = pneg %p77
      $region18: #{downsample_generator_forward.1} parent=11 // pred_check_branch
        %123 = sbr.rel (%p121) target = $region20
      $region19: #{downsample_generator_forward.1} parent=11 // pred_region
        _
      $region20: #{downsample_generator_forward.1} parent=11 // pred_fallthru
        _
    $region12: #{downsample_generator_forward.1} parent=5 // pred_fallthru
      _
    %p124 = scmp.lt.s32.totalorder %s9, 2
    // Predicated region
    $region21: #{downsample_generator_forward.1} parent=5 // pred_check
      %p125 = pneg %p124
    $region22: #{downsample_generator_forward.1} parent=5 // pred_check_branch
      %127 = sbr.rel (%p125) target = $region24
    $region23: #{downsample_generator_forward.1} parent=5 // pred_region
      // Predicated region
      $region25: #{downsample_generator_forward.1} parent=23 // pred_check
        %p128 = pneg %p29
      $region26: #{downsample_generator_forward.1} parent=23 // pred_check_branch
        %130 = sbr.rel (%p128) target = $region28
      $region27: #{downsample_generator_forward.1} parent=23 // pred_region
        %p131 = scmp.lt.s32.totalorder %s9, 1
        %s132 = scalar_select %p131, %s9, 1
        %s133 = smul.addr %s132, 5
        %s134 = smul.addr %s133, 4
        %s135 = scalar_lea.vmem %s0, %s134
      $region28: #{downsample_generator_forward.1} parent=23 // pred_fallthru
        _
    $region24: #{downsample_generator_forward.1} parent=5 // pred_fallthru
      _
    %p136 = scmp.le.s32.totalorder 1, %s9
    %p137 = scmp.lt.s32.totalorder %s9, 3
    %p138 = pnand %p136, %p137
    %p139 = pneg %p138
    // Predicated region
    $region29: #{downsample_generator_forward.1} parent=5 // pred_check
      _
    $region30: #{downsample_generator_forward.1} parent=5 // pred_check_branch
      %141 = sbr.rel (%p138) target = $region32
    $region31: #{downsample_generator_forward.1} parent=5 // pred_region
      %s142 = ssub.s32 %s9, 1
      %p143 = scmp.lt.s32.totalorder %s14, 1
      %s144 = scalar_select %p143, %s14, 1
      %s145 = smul.addr %s144, 5
      %s146 = smul.addr %s145, 4
      %s147 = scalar_lea.vmem %s0, %s146
      %p148 = pneg %p35
      %p149 = pneg %p32
      %p150 = pneg %p56
      %p151 = pneg %p53
      %p152 = pneg %p77
      %p153 = pneg %p74
      %p154 = pneg %p103
      %p155 = pneg %p100
      %p156 = scmp.lt.s32.totalorder %s14, 1
      %s157 = scalar_select %p156, %s14, 1
      %s158 = smul.addr %s157, 8
      %s159 = scalar_lea.vmem %s3, %s158
      %p160 = scmp.lt.s32.totalorder %s14, 1
      %s161 = scalar_select %p160, %s14, 1
      %s162 = smul.addr %s161, 5
      %s163 = smul.addr %s162, 4
      %s164 = scalar_lea.vmem %s0, %s163
      %p165 = scmp.lt.s32.totalorder %s14, 1
      %s166 = scalar_select %p165, %s14, 1
      %s167 = smul.addr %s166, 8
      %s168 = scalar_lea.vmem %s3, %s167
      %v170 = vld [vmem:[%s1] sm:$0xf]
      %v171 = vld [vmem:[%s1 + $0x4] sm:$0xf]
      %v172 = vld [vmem:[%s2] sm:$0xff]
      %v173 = vld [vmem:[%s2 + $0x8] sm:$0xff]
      %v174 = vld [vmem:[%s164] sm:$0xf]
      %v175 = vld [vmem:[%s164 + $0x4] sm:$0xf]
      %v176 = vld [vmem:[%s164 + $0x8] sm:$0xf]
      %v177 = vld [vmem:[%s164 + $0xc] sm:$0xf]
      %v178 = vld [vmem:[%s164 + $0x10] sm:$0x3]
      %v181 = vunpack.c.l.b16 %v170
      %v182 = vunpack.c.l.b16 %v171
      %v183 = vpack.c.b16 %v182, %v181
      %v189 = vunpack.c.l.b16 %v174
      %v190 = vunpack.c.l.b16 %v175
      %v191 = vunpack.c.l.b16 %v176
      %v192 = vunpack.c.l.b16 %v177
      %v193 = vunpack.c.l.b16 %v178
      %v194 = vpack.c.b16 %v190, %v189
      %v195 = vpack.c.b16 %v192, %v191
      %v196 = vpack.c.b16 %v193, %v193
      %vm199 = vcmask 293888
      %v201 = vsel %vm199, %v183, 0
      %vm203 = vcmask 1041408
      %v205 = vsel %vm203, %v196, 0
      %207 = vmatprep.subr.bf16.mxu0 0
      %208 = vmatpush1.bf16.msra.mxu0 0
      %209 = vmatprep.subr.bf16.mxu0 0
      %210 = vmatpush1.bf16.msra.mxu0 0
      %211 = vmatprep.subr.bf16.mxu0 0
      %212 = vmatpush1.bf16.msra.mxu0 0
      %213 = vmatprep.subr.bf16.mxu0 0
      %214 = vmatpush1.bf16.msra.mxu0 0
      %215 = vmatprep.subr.bf16.mxu0 0
      %216 = vmatpush1.bf16.msra.mxu0 0
      %217 = vmatprep.subr.bf16.mxu0 0
      %218 = vmatpush1.bf16.msra.mxu0 %v205
      %219 = vmatprep.subr.bf16.mxu0 0
      %220 = vmatpush1.bf16.msra.mxu0 %v195
      %221 = vmatprep.subr.bf16.mxu0 0
      %222 = vmatpush1.bf16.msra.mxu0 %v194
      %223 = vmatprep.subr.bf16.mxu0 0
      %224 = vmatpush2.bf16.msra.mxu0 0
      %225 = vmatprep.subr.bf16.mxu0 0
      %226 = vmatpush2.bf16.msra.mxu0 0
      %227 = vmatprep.subr.bf16.mxu0 0
      %228 = vmatpush2.bf16.msra.mxu0 0
      %229 = vmatprep.subr.bf16.mxu0 0
      %230 = vmatpush2.bf16.msra.mxu0 0
      %231 = vmatprep.subr.bf16.mxu0 0
      %232 = vmatpush2.bf16.msra.mxu0 0
      %233 = vmatprep.subr.bf16.mxu0 0
      %234 = vmatpush2.bf16.msra.mxu0 0
      %235 = vmatprep.subr.bf16.mxu0 0
      %236 = vmatpush2.bf16.msra.mxu0 0
      %237 = vmatprep.subr.bf16.mxu0 0
      %238 = vmatpush2.bf16.msra.mxu0 0
      %239 = vmatprep.mubr.bf16.mxu0 0
      %240 = vmatmul.mubr.bf16.gmra.mxu0 %v201
      %v241 = vpop.f32.mrf.mxu0
      %v242 = vadd.f32 0.0, %v241
      %v243 = vpop.f32.mrf.mxu0
      %v244 = vpop.f32.mrf.mxu0
      %v245 = vadd.f32 0.0, %v244
      %v246 = vpop.f32.mrf.mxu0
      %247 = vdwg.mxu0
      %vm248 = vcmask 523264
      %v249 = vsel %vm248, %v242, 0.0
      %250 = vadd.xlane.f32.xlu0 %v249
      %v251 = vpop.xlane.xlu0 %250
      %v252 = vsel %vm248, %v245, 0.0
      %253 = vadd.xlane.f32.xlu0 %v252
      %v254 = vpop.xlane.xlu0 %253
      %v255 = vrcp.pop 64.0
      %v256 = vmul.f32 %v251, %v255
      %v257 = vmul.f32 %v254, %v255
      %v258 = vsub.f32 %v242, %v256
      %v259 = vsub.f32 %v245, %v257
      %v260 = vmul.f32 %v258, %v258
      %v261 = vmul.f32 %v259, %v259
      %v262 = vsel %vm248, %v260, 0.0
      %263 = vadd.xlane.f32.xlu0 %v262
      %v264 = vpop.xlane.xlu0 %263
      %v265 = vsel %vm248, %v261, 0.0
      %266 = vadd.xlane.f32.xlu0 %v265
      %v267 = vpop.xlane.xlu0 %266
      %v268 = vmul.f32 %v264, %v255
      %v269 = vmul.f32 %v267, %v255
      %v270 = vadd.f32 %v268, 1e-05
      %v271 = vadd.f32 %v269, 1e-05
      %v272 = vrsqrt.pop %v270
      %v273 = vrsqrt.pop %v271
      %v274 = vmul.f32 %v172, %v272
      %v275 = vmul.f32 %v173, %v273
      %277 = vset.pattern.permute.xlu0 0
      %278 = vperm.xlu0 %277, %v274
      %v279 = vpop.permute.xlu0 %278
      %282 = vset.pattern.permute.xlu0 0
      %283 = vperm.xlu0 %282, %v275
      %v284 = vpop.permute.xlu0 %283
      %v286 = vmul.f32 %v258, %v279
      %v287 = vmul.f32 %v259, %v284
      %289 = vset.pattern.permute.xlu0 1
      %290 = vperm.xlu0 %289, %v172
      %v291 = vpop.permute.xlu0 %290
      %294 = vset.pattern.permute.xlu0 1
      %295 = vperm.xlu0 %294, %v173
      %v296 = vpop.permute.xlu0 %295
      %v298 = vadd.f32 %v286, %v291
      %v299 = vadd.f32 %v287, %v296
      %v300 = vxor.u32 %v299, 2147483648
      %v301 = vmul.f32 %v300, 1.442695
      %v302 = vpow.pop %v301
      %v303 = vadd.f32 %v302, 1.0
      %v304 = vrcp.pop %v303
      %v305 = vmul.f32 1.0, %v304
      %v306 = vmul.f32 %v298, %v305
      %307 = vst.msk [vmem:[%s168] sm:$0xff] %vm248, %v306
      %p308 = scmp.lt.s32.totalorder %s14, 1
      %s309 = scalar_select %p308, %s14, 1
      %s310 = smul.addr %s309, 8
      %s311 = scalar_lea.vmem %s3, %s310
      // Predicated region
      $region33: #{downsample_generator_forward.1} parent=31 // pred_check
        %p312 = pneg %p100
      $region34: #{downsample_generator_forward.1} parent=31 // pred_check_branch
        %314 = sbr.rel (%p312) target = $region36
      $region35: #{downsample_generator_forward.1} parent=31 // pred_region
        _
      $region36: #{downsample_generator_forward.1} parent=31 // pred_fallthru
        _
    $region32: #{downsample_generator_forward.1} parent=5 // pred_fallthru
      _
    %p315 = scmp.le.s32.totalorder 2, %s9
    // Predicated region
    $region37: #{downsample_generator_forward.1} parent=5 // pred_check
      %p316 = pneg %p315
    $region38: #{downsample_generator_forward.1} parent=5 // pred_check_branch
      %318 = sbr.rel (%p316) target = $region40
    $region39: #{downsample_generator_forward.1} parent=5 // pred_region
      %s319 = ssub.s32 %s9, 2
      // Predicated region
      $region41: #{downsample_generator_forward.1} parent=39 // pred_check
        %p320 = pneg %p106
      $region42: #{downsample_generator_forward.1} parent=39 // pred_check_branch
        %322 = sbr.rel (%p320) target = $region44
      $region43: #{downsample_generator_forward.1} parent=39 // pred_region
        %p323 = scmp.lt.s32.totalorder %s15, 1
        %s324 = scalar_select %p323, %s15, 1
        %s325 = smul.addr %s324, 8
        %s326 = scalar_lea.vmem %s3, %s325
      $region44: #{downsample_generator_forward.1} parent=39 // pred_fallthru
        _
    $region40: #{downsample_generator_forward.1} parent=5 // pred_fallthru
      _
  $region6: #{downsample_generator_forward.1} parent=0 // loop_footer
    %s13 = sadd.s32 1, %s9
  $region7: #{downsample_generator_forward.1} parent=0 // loop_footer_branch
    %8 = sbr.rel target = $region3
  $region8: #{downsample_generator_forward.1} parent=0 // loop_exit
    _

</llo_original>
